<compile_context>
chip_gen: v7x
topology: tpu7x:2x2x1
jax: 0.10.0
libtpu: 0.0.40
codegen_flags: <defaults>
</compile_context>

<pallas_src>
import functools

import numpy as np
import jax
import jax.numpy as jnp
from jax.experimental import pallas as pl
from jax.experimental.pallas import tpu as pltpu


def _round_up(x, m):
    return (x + m - 1) // m * m


def _cdiv(a, b):
    return (a + b - 1) // b


SMALL_ORDER = ("seg", "age", "gender", "ethni", "ins", "posi")


# ---------------------------------------------------------------------------
# Shared in-kernel helpers
# ---------------------------------------------------------------------------
def _layernorm(emb, gamma, beta, h_true):
    tm, hp = emb.shape
    if h_true == hp:
        mean = jnp.mean(emb, axis=-1, keepdims=True)
        xc = emb - mean
        var = jnp.mean(xc * xc, axis=-1, keepdims=True)
    else:
        # Padded table columns are exactly zero, so plain sums only see the
        # true columns; mask the centered values before the variance.
        col = jax.lax.broadcasted_iota(jnp.int32, (tm, hp), 1)
        valid = (col < h_true).astype(jnp.float32)
        inv_h = 1.0 / float(h_true)
        mean = jnp.sum(emb, axis=-1, keepdims=True) * inv_h
        xc = (emb - mean) * valid
        var = jnp.sum(xc * xc, axis=-1, keepdims=True) * inv_h
    return xc * jax.lax.rsqrt(var + 1e-12) * gamma + beta


def _multihot_matmul(ids, tab_ref, n_id_cols):
    """Sum of n_id_cols embedding rows via ONE (TM,K)@(K,Hp) MXU matmul.

    ids columns index disjoint row ranges of the fused table, so the multi-hot
    entries are exact small integers in the table dtype (bf16 build is exact).
    """
    tm = ids.shape[0]
    kk = tab_ref.shape[0]
    dt = tab_ref.dtype
    iota = jax.lax.broadcasted_iota(jnp.int32, (tm, kk), 1)
    multihot = jnp.zeros((tm, kk), dt)
    for j in range(n_id_cols):
        multihot += (ids[:, j:j + 1] == iota).astype(dt)
    return jnp.dot(multihot, tab_ref[...], preferred_element_type=jnp.float32)


# ---------------------------------------------------------------------------
# Kernel 1: fully fused path (word table folded into the one-hot table)
# ---------------------------------------------------------------------------
def _fused_kernel(ids_ref, tab_ref, gamma_ref, beta_ref, out_ref, *,
                  n_id_cols, h_true):
    emb = _multihot_matmul(ids_ref[...], tab_ref, n_id_cols)
    out_ref[...] = _layernorm(emb, gamma_ref[...], beta_ref[...], h_true)


# ---------------------------------------------------------------------------
# Kernel 2: HBM word gather, cross-tile double-buffered
# ---------------------------------------------------------------------------
def _gather_kernel(
    word_ids_sm,                       # (n_pad,) int32, SMEM (scalar prefetch)
    ids_ref,                           # (TM, 8) int32, offsets pre-added
    small_tab_ref,                     # (K, Hp), resident
    gamma_ref, beta_ref,               # (1, Hp) f32, resident
    word_tab_hbm,                      # (Vw, Hp) HBM (pl.ANY)
    out_ref,                           # (TM, Hp) f32
    word_buf,                          # (2, TM, Hp) VMEM scratch
    sem,                               # DMA semaphores, shape (2,)
    *, n_id_cols, h_true,
):
    tm = out_ref.shape[0]
    o = pl.program_id(0)               # "parallel" chunk (megacore shardable)
    j = pl.program_id(1)               # "arbitrary" tile within the chunk
    tpo = pl.num_programs(1)
    tile = o * tpo + j
    slot = jax.lax.rem(tile, 2)

    def issue_gather(tile_idx, slot_idx):
        base = tile_idx * tm
        def body(r, carry):
            row = word_ids_sm[base + r]
            pltpu.make_async_copy(
                word_tab_hbm.at[pl.ds(row, 1), :],
                word_buf.at[slot_idx, pl.ds(r, 1), :],
                sem.at[slot_idx],
            ).start()
            return carry
        # Unrolled issue: descriptor pushes pack into the vector-misc slot
        # instead of paying rolled scalar-loop overhead per row.
        jax.lax.fori_loop(0, tm, body, 0, unroll=8)

    # Prime: first tile of THIS core's chunk gathers its own rows.  (Relying on
    # tile==0 would break under v7x megacore splitting of a 1-D grid.)
    @pl.when(j == 0)
    def _():
        issue_gather(tile, slot)

    # Cross-tile prefetch: fetch the NEXT tile's rows while this tile computes,
    # so the HBM gather hides behind a full tile of work, not just one matmul.
    @pl.when(j + 1 < tpo)
    def _():
        issue_gather(tile + 1, 1 - slot)

    # Fused small-vocab gather overlaps with the in-flight DMAs.
    small_emb = _multihot_matmul(ids_ref[...], small_tab_ref, n_id_cols)

    # ONE aggregate wait: DMA semaphores count bytes, so a single descriptor
    # sized to the full (TM, Hp) slot matches the TM uniform (1, Hp) row copies.
    pltpu.make_async_copy(word_buf.at[slot], word_buf.at[slot], sem.at[slot]).wait()

    emb = small_emb + word_buf[slot].astype(jnp.float32)
    out_ref[...] = _layernorm(emb, gamma_ref[...], beta_ref[...], h_true)


# ---------------------------------------------------------------------------
# Wrapper
# ---------------------------------------------------------------------------
def _combine_tables(tables, names, hp, dtype):
    """Concatenate tables into one row-offset table padded to K=round_up(rows,128)."""
    offsets, parts, row = {}, [], 0
    for name in names:
        t = jnp.asarray(tables[name], jnp.float32)
        offsets[name] = row
        row += t.shape[0]
        parts.append(jnp.pad(t, ((0, 0), (0, hp - t.shape[1]))))
    k = _round_up(max(row, 1), 128)
    combined = jnp.concatenate(parts, axis=0)
    combined = jnp.pad(combined, ((0, k - row), (0, 0)))
    return combined.astype(dtype), offsets


def bert_embeddings(word_ids, seg_ids, age_ids, gender_ids, ethni_ids, ins_ids,
                    posi_ids, tables, gamma, beta, *,
                    max_tile=256,                 # raise to 512/1024 on v5e/v6e (128 MiB VMEM)
                    small_dtype=jnp.bfloat16,     # pass jnp.float32 on v5e (no bf16 VALU)
                    word_dtype=jnp.float32,       # pass jnp.bfloat16 on v5e (HBM-BW bound)
                    fuse_word_threshold_rows=2048,
                    force_hbm_gather=False,
                    outer_chunks=2):
    B, S = word_ids.shape
    Vw, H = tables["word"].shape
    Hp = _round_up(H, 128)
    N = B * S

    # nn.Embedding raises on out-of-range ids; a raw HBM DMA would fault or read
    # garbage, so clamp defensively.  # TODO(synk): surface OOB ids like PyTorch.
    word_ids = jnp.clip(jnp.asarray(word_ids, jnp.int32), 0, Vw - 1)

    small_rows = sum(int(tables[n].shape[0]) for n in SMALL_ORDER)
    fuse_word = (not force_hbm_gather) and (Vw + small_rows <= fuse_word_threshold_rows)

    table_names = SMALL_ORDER + ("word",) if fuse_word else SMALL_ORDER
    n_id_cols = 7 if fuse_word else 6
    tab, offs = _combine_tables(tables, table_names, Hp, small_dtype)
    K = tab.shape[0]

    # --- token tile + VMEM budget (computed from actual buffer sizes) --------
    small_b = jnp.dtype(small_dtype).itemsize
    word_b = jnp.dtype(word_dtype).itemsize

    def vmem_est(tm_):
        b = 2 * tm_ * 8 * 4 + 2 * tm_ * Hp * 4        # packed ids + out (double-buffered)
        b += 2 * K * Hp * small_b + 4 * Hp * 4        # fused table + gamma/beta
        b += tm_ * K * 4 + 3 * tm_ * Hp * 4           # elementwise temporaries
        if not fuse_word:
            b += 2 * tm_ * Hp * word_b                # cross-tile word double buffer
        return b

    tm = _round_up(min(max_tile, _round_up(N, 8)), 8)
    while tm > 64 and vmem_est(tm) > 40 * 1024 * 1024:   # keep well under v7x's 64 MiB
        tm //= 2
    tm = max(8, (tm // 8) * 8)
    vmem_limit = int(min(64 * 1024 * 1024,
                         max(32 * 1024 * 1024, vmem_est(tm) * 3 // 2)))
    n_tiles = _cdiv(N, tm)

    gamma2 = jnp.pad(jnp.asarray(gamma, jnp.float32).reshape(1, H), ((0, 0), (0, Hp - H)))
    beta2 = jnp.pad(jnp.asarray(beta, jnp.float32).reshape(1, H), ((0, 0), (0, Hp - H)))

    # One packed id array: 6 small-vocab columns (+ word column in fused mode),
    # remaining columns filled with -1 (never matches any table row).
    cols = [jnp.asarray(seg_ids, jnp.int32).reshape(-1) + offs["seg"],
            jnp.asarray(age_ids, jnp.int32).reshape(-1) + offs["age"],
            jnp.asarray(gender_ids, jnp.int32).reshape(-1) + offs["gender"],
            jnp.asarray(ethni_ids, jnp.int32).reshape(-1) + offs["ethni"],
            jnp.asarray(ins_ids, jnp.int32).reshape(-1) + offs["ins"],
            jnp.asarray(posi_ids, jnp.int32).reshape(-1) + offs["posi"]]
    if fuse_word:
        cols.append(word_ids.reshape(-1) + offs["word"])
    while len(cols) < 8:
        cols.append(jnp.full((N,), -1, jnp.int32))
    ids_packed = jnp.stack(cols, axis=1)                     # (N, 8)

    if fuse_word:
        # ---------------- fully fused path (no HBM gather) -------------------
        n_pad = n_tiles * tm
        ids_packed = jnp.pad(ids_packed, ((0, n_pad - N), (0, 0)))
        out = pl.pallas_call(
            functools.partial(_fused_kernel, n_id_cols=n_id_cols, h_true=H),
            grid=(n_tiles,),
            in_specs=[pl.BlockSpec((tm, 8), lambda i: (i, 0)),
                      pl.BlockSpec((K, Hp), lambda i: (0, 0)),
                      pl.BlockSpec((1, Hp), lambda i: (0, 0)),
                      pl.BlockSpec((1, Hp), lambda i: (0, 0))],
            out_specs=pl.BlockSpec((tm, Hp), lambda i: (i, 0)),
            out_shape=jax.ShapeDtypeStruct((n_pad, Hp), jnp.float32),
            compiler_params=pltpu.CompilerParams(
                dimension_semantics=("parallel",),
                vmem_limit_bytes=vmem_limit),
        )(ids_packed, tab, gamma2, beta2)
    else:
        # ---------------- HBM word-gather path --------------------------------
        outer = max(1, min(outer_chunks, n_tiles))
        tpo = _cdiv(n_tiles, outer)
        n_pad = outer * tpo * tm
        if n_pad > 128 * 1024:
            raise ValueError("word_ids scalar prefetch would exceed SMEM; "
                             "shard the call over the batch dimension")
        ids_packed = jnp.pad(ids_packed, ((0, n_pad - N), (0, 0)))
        wid = jnp.pad(word_ids.reshape(-1), (0, n_pad - N))
        word_tab = jnp.pad(jnp.asarray(tables["word"], jnp.float32),
                           ((0, 0), (0, Hp - H))).astype(word_dtype)

        def tile_map(o, j, wid_ref):
            return (o * tpo + j, 0)

        def const_map(o, j, wid_ref):
            return (0, 0)

        grid_spec = pltpu.PrefetchScalarGridSpec(
            num_scalar_prefetch=1,                    # word ids -> SMEM
            grid=(outer, tpo),
            in_specs=[pl.BlockSpec((tm, 8), tile_map),
                      pl.BlockSpec((K, Hp), const_map),
                      pl.BlockSpec((1, Hp), const_map),
                      pl.BlockSpec((1, Hp), const_map),
                      pl.BlockSpec(memory_space=pl.ANY)],   # word table stays in HBM
            out_specs=pl.BlockSpec((tm, Hp), tile_map),
            scratch_shapes=[pltpu.VMEM((2, tm, Hp), word_dtype),
                            pltpu.SemaphoreType.DMA((2,))],
        )
        out = pl.pallas_call(
            functools.partial(_gather_kernel, n_id_cols=n_id_cols, h_true=H),
            grid_spec=grid_spec,
            out_shape=jax.ShapeDtypeStruct((n_pad, Hp), jnp.float32),
            compiler_params=pltpu.CompilerParams(
                dimension_semantics=("parallel", "arbitrary"),
                vmem_limit_bytes=vmem_limit),
        )(wid, ids_packed, tab, gamma2, beta2, word_tab)

    return out[:N, :H].reshape(B, S, H)


# ---------------------------------------------------------------------------
# Reference + demo
# ---------------------------------------------------------------------------
def _init_posi_embedding(max_position_embedding, hidden_size):
    lookup_table = np.zeros((max_position_embedding, hidden_size), dtype=np.float32)
    for p in range(max_position_embedding):
        for idx in np.arange(0, hidden_size, step=2):
            lookup_table[p, idx] = np.sin(p / 10000 ** (2 * idx / hidden_size))
    for p in range(max_position_embedding):
        for idx in np.arange(1, hidden_size, step=2):
            lookup_table[p, idx] = np.cos(p / 10000 ** (2 * idx / hidden_size))
    return jnp.asarray(lookup_table)


def _reference(word_ids, seg_ids, age_ids, gender_ids, ethni_ids, ins_ids,
               posi_ids, tables, gamma, beta, quant_dtype=None, quant_word=False):
    def tab(name):
        t = jnp.asarray(tables[name], jnp.float32)
        if quant_dtype is not None and (name != "word" or quant_word):
            t = t.astype(quant_dtype).astype(jnp.float32)
        return t
    emb = (tab("word")[word_ids] + tab("seg")[seg_ids] + tab("age")[age_ids]
           + tab("gender")[gender_ids] + tab("ethni")[ethni_ids]
           + tab("ins")[ins_ids] + tab("posi")[posi_ids])
    mean = jnp.mean(emb, axis=-1, keepdims=True)
    xc = emb - mean
    var = jnp.mean(xc * xc, axis=-1, keepdims=True)
    return (xc / jnp.sqrt(var + 1e-12)) * jnp.asarray(gamma).reshape(-1) \
        + jnp.asarray(beta).reshape(-1)


if __name__ == "__main__":
    B, S, H = 2, 8, 128
    vocab_size = 64
    seg_vocab_size = 8
    age_vocab_size = 16
    gender_vocab_size = 8
    ethni_vocab_size = 8
    ins_vocab_size = 8
    max_position_embeddings = 16

    key = jax.random.PRNGKey(0)
    keys = jax.random.split(key, 16)

    def emb_table(k, v):
        return (0.02 * jax.random.normal(k, (v, H))).astype(jnp.float32)

    tables = {
        "word":   emb_table(keys[0], vocab_size),
        "seg":    emb_table(keys[1], seg_vocab_size),
        "age":    emb_table(keys[2], age_vocab_size),
        "gender": emb_table(keys[3], gender_vocab_size),
        "ethni":  emb_table(keys[4], ethni_vocab_size),
        "ins":    emb_table(keys[5], ins_vocab_size),
        "posi":   _init_posi_embedding(max_position_embeddings, H),
    }
    gamma = jnp.ones((H,), jnp.float32)
    beta = jnp.zeros((H,), jnp.float32)

    word_ids = jax.random.randint(keys[6], (B, S), 0, vocab_size).astype(jnp.int32)
    seg_ids = jax.random.randint(keys[7], (B, S), 0, seg_vocab_size).astype(jnp.int32)
    age_ids = jax.random.randint(keys[8], (B, S), 0, age_vocab_size).astype(jnp.int32)
    gender_ids = jax.random.randint(keys[9], (B, S), 0, gender_vocab_size).astype(jnp.int32)
    ethni_ids = jax.random.randint(keys[10], (B, S), 0, ethni_vocab_size).astype(jnp.int32)
    ins_ids = jax.random.randint(keys[11], (B, S), 0, ins_vocab_size).astype(jnp.int32)
    posi_ids = jnp.broadcast_to(jnp.arange(S, dtype=jnp.int32), (B, S))

    id_args = (word_ids, seg_ids, age_ids, gender_ids, ethni_ids, ins_ids, posi_ids)
    args = id_args + (tables, gamma, beta)

    ref_f32 = _reference(*id_args, tables, gamma, beta)

    # Path 1: fully fused one-hot path (small vocab -> word table VMEM resident).
    out_fused = jax.block_until_ready(bert_embeddings(*args))
    ref_all_q = _reference(*id_args, tables, gamma, beta,
                           quant_dtype=jnp.bfloat16, quant_word=True)
    np.testing.assert_allclose(np.asarray(out_fused), np.asarray(ref_all_q),
                               rtol=1e-4, atol=1e-4)
    np.testing.assert_allclose(np.asarray(out_fused), np.asarray(ref_f32),
                               rtol=2e-2, atol=2e-2)

    # Path 2: HBM word gather, single chunk with >=2 inner tiles so the
    # cross-tile prefetch + aggregate-wait path is exercised.
    out_g1 = jax.block_until_ready(
        bert_embeddings(*args, force_hbm_gather=True, max_tile=8, outer_chunks=1))
    ref_small_q = _reference(*id_args, tables, gamma, beta,
                             quant_dtype=jnp.bfloat16, quant_word=False)
    np.testing.assert_allclose(np.asarray(out_g1), np.asarray(ref_small_q),
                               rtol=1e-4, atol=1e-4)

    # Path 3: HBM word gather split over two "parallel" outer chunks
    # (megacore layout; each chunk primes its own double buffer).
    out_g2 = jax.block_until_ready(
        bert_embeddings(*args, force_hbm_gather=True, max_tile=8, outer_chunks=2))
    np.testing.assert_allclose(np.asarray(out_g2), np.asarray(ref_small_q),
                               rtol=1e-4, atol=1e-4)
    np.testing.assert_allclose(np.asarray(out_g2), np.asarray(ref_f32),
                               rtol=2e-2, atol=2e-2)

    print("KERNEL_OK")
</pallas_src>

<mosaic_0001>
module attributes {stable_mosaic.version = 11 : i64} {
  func.func @_fused_kernel(%arg0: i32, %arg1: memref<16x8xi32, #tpu.memory_space<vmem>>, %arg2: memref<128x128xbf16, #tpu.memory_space<vmem>>, %arg3: memref<1x128xf32, #tpu.memory_space<vmem>>, %arg4: memref<1x128xf32, #tpu.memory_space<vmem>>, %arg5: memref<16x128xf32, #tpu.memory_space<vmem>>) attributes {dimension_semantics = [#tpu.dimension_semantics<parallel>], iteration_bounds = array<i64: 1>, scalar_prefetch = 0 : i64, scratch_operands = 0 : i64, tpu.core_type = #tpu.core_type<tc>, window_params = [{transform_indices = @transform_0, window_bounds = array<i64: 16, 8>}, {pipeline_mode = #tpu.pipeline_mode<synchronous>, transform_indices = @transform_1, window_bounds = array<i64: 128, 128>}, {pipeline_mode = #tpu.pipeline_mode<synchronous>, transform_indices = @transform_2, window_bounds = array<i64: 1, 128>}, {pipeline_mode = #tpu.pipeline_mode<synchronous>, transform_indices = @transform_3, window_bounds = array<i64: 1, 128>}, {transform_indices = @transform_4, window_bounds = array<i64: 16, 128>}]} {
    %c0 = arith.constant 0 : index
    %c0_0 = arith.constant 0 : index
    %0 = vector.load %arg1[%c0, %c0_0] : memref<16x8xi32, #tpu.memory_space<vmem>>, vector<16x8xi32>
    %1 = tpu.iota {dimensions = array<i32: 1>} : vector<16x128xi32>
    %cst = arith.constant 0.000000e+00 : bf16
    %2 = vector.broadcast %cst : bf16 to vector<16x128xbf16>
    %3 = vector.extract_strided_slice %0 {offsets = [0, 0], sizes = [16, 1], strides = [1, 1]} : vector<16x8xi32> to vector<16x1xi32>
    %4 = vector.broadcast %3 : vector<16x1xi32> to vector<16x128xi32>
    %5 = arith.cmpi eq, %4, %1 : vector<16x128xi32>
    %6 = arith.extui %5 : vector<16x128xi1> to vector<16x128xi32>
    %7 = arith.sitofp %6 : vector<16x128xi32> to vector<16x128xf32>
    %8 = arith.truncf %7 : vector<16x128xf32> to vector<16x128xbf16>
    %9 = arith.addf %2, %8 : vector<16x128xbf16>
    %10 = vector.extract_strided_slice %0 {offsets = [0, 1], sizes = [16, 1], strides = [1, 1]} : vector<16x8xi32> to vector<16x1xi32>
    %11 = vector.broadcast %10 : vector<16x1xi32> to vector<16x128xi32>
    %12 = arith.cmpi eq, %11, %1 : vector<16x128xi32>
    %13 = arith.extui %12 : vector<16x128xi1> to vector<16x128xi32>
    %14 = arith.sitofp %13 : vector<16x128xi32> to vector<16x128xf32>
    %15 = arith.truncf %14 : vector<16x128xf32> to vector<16x128xbf16>
    %16 = arith.addf %9, %15 : vector<16x128xbf16>
    %17 = vector.extract_strided_slice %0 {offsets = [0, 2], sizes = [16, 1], strides = [1, 1]} : vector<16x8xi32> to vector<16x1xi32>
    %18 = vector.broadcast %17 : vector<16x1xi32> to vector<16x128xi32>
    %19 = arith.cmpi eq, %18, %1 : vector<16x128xi32>
    %20 = arith.extui %19 : vector<16x128xi1> to vector<16x128xi32>
    %21 = arith.sitofp %20 : vector<16x128xi32> to vector<16x128xf32>
    %22 = arith.truncf %21 : vector<16x128xf32> to vector<16x128xbf16>
    %23 = arith.addf %16, %22 : vector<16x128xbf16>
    %24 = vector.extract_strided_slice %0 {offsets = [0, 3], sizes = [16, 1], strides = [1, 1]} : vector<16x8xi32> to vector<16x1xi32>
    %25 = vector.broadcast %24 : vector<16x1xi32> to vector<16x128xi32>
    %26 = arith.cmpi eq, %25, %1 : vector<16x128xi32>
    %27 = arith.extui %26 : vector<16x128xi1> to vector<16x128xi32>
    %28 = arith.sitofp %27 : vector<16x128xi32> to vector<16x128xf32>
    %29 = arith.truncf %28 : vector<16x128xf32> to vector<16x128xbf16>
    %30 = arith.addf %23, %29 : vector<16x128xbf16>
    %31 = vector.extract_strided_slice %0 {offsets = [0, 4], sizes = [16, 1], strides = [1, 1]} : vector<16x8xi32> to vector<16x1xi32>
    %32 = vector.broadcast %31 : vector<16x1xi32> to vector<16x128xi32>
    %33 = arith.cmpi eq, %32, %1 : vector<16x128xi32>
    %34 = arith.extui %33 : vector<16x128xi1> to vector<16x128xi32>
    %35 = arith.sitofp %34 : vector<16x128xi32> to vector<16x128xf32>
    %36 = arith.truncf %35 : vector<16x128xf32> to vector<16x128xbf16>
    %37 = arith.addf %30, %36 : vector<16x128xbf16>
    %38 = vector.extract_strided_slice %0 {offsets = [0, 5], sizes = [16, 1], strides = [1, 1]} : vector<16x8xi32> to vector<16x1xi32>
    %39 = vector.broadcast %38 : vector<16x1xi32> to vector<16x128xi32>
    %40 = arith.cmpi eq, %39, %1 : vector<16x128xi32>
    %41 = arith.extui %40 : vector<16x128xi1> to vector<16x128xi32>
    %42 = arith.sitofp %41 : vector<16x128xi32> to vector<16x128xf32>
    %43 = arith.truncf %42 : vector<16x128xf32> to vector<16x128xbf16>
    %44 = arith.addf %37, %43 : vector<16x128xbf16>
    %45 = vector.extract_strided_slice %0 {offsets = [0, 6], sizes = [16, 1], strides = [1, 1]} : vector<16x8xi32> to vector<16x1xi32>
    %46 = vector.broadcast %45 : vector<16x1xi32> to vector<16x128xi32>
    %47 = arith.cmpi eq, %46, %1 : vector<16x128xi32>
    %48 = arith.extui %47 : vector<16x128xi1> to vector<16x128xi32>
    %49 = arith.sitofp %48 : vector<16x128xi32> to vector<16x128xf32>
    %50 = arith.truncf %49 : vector<16x128xf32> to vector<16x128xbf16>
    %51 = arith.addf %44, %50 : vector<16x128xbf16>
    %c0_1 = arith.constant 0 : index
    %c0_2 = arith.constant 0 : index
    %52 = vector.load %arg2[%c0_1, %c0_2] : memref<128x128xbf16, #tpu.memory_space<vmem>>, vector<128x128xbf16>
    %cst_3 = arith.constant dense<0.000000e+00> : vector<16x128xf32>
    %53 = tpu.matmul %51, %52, %cst_3 {dimension_numbers = #tpu.dot_dimension_numbers<[1], [0], [0], [1], [0, 0, 1, 1], [], []>} : vector<16x128xbf16>, vector<128x128xbf16>, vector<16x128xf32> -> vector<16x128xf32>
    %c0_4 = arith.constant 0 : index
    %c0_5 = arith.constant 0 : index
    %54 = vector.load %arg3[%c0_4, %c0_5] : memref<1x128xf32, #tpu.memory_space<vmem>>, vector<1x128xf32>
    %c0_6 = arith.constant 0 : index
    %c0_7 = arith.constant 0 : index
    %55 = vector.load %arg4[%c0_6, %c0_7] : memref<1x128xf32, #tpu.memory_space<vmem>>, vector<1x128xf32>
    %cst_8 = arith.constant dense<0.000000e+00> : vector<16xf32>
    %56 = vector.multi_reduction <add>, %53, %cst_8 [1] : vector<16x128xf32> to vector<16xf32>
    %57 = vector.shape_cast %56 : vector<16xf32> to vector<16x1xf32>
    %cst_9 = arith.constant 1.280000e+02 : f32
    %58 = vector.broadcast %cst_9 : f32 to vector<16x1xf32>
    %59 = arith.divf %57, %58 : vector<16x1xf32>
    %60 = vector.broadcast %59 : vector<16x1xf32> to vector<16x128xf32>
    %61 = arith.subf %53, %60 : vector<16x128xf32>
    %62 = arith.mulf %61, %61 : vector<16x128xf32>
    %cst_10 = arith.constant dense<0.000000e+00> : vector<16xf32>
    %63 = vector.multi_reduction <add>, %62, %cst_10 [1] : vector<16x128xf32> to vector<16xf32>
    %64 = vector.shape_cast %63 : vector<16xf32> to vector<16x1xf32>
    %cst_11 = arith.constant 1.280000e+02 : f32
    %65 = vector.broadcast %cst_11 : f32 to vector<16x1xf32>
    %66 = arith.divf %64, %65 : vector<16x1xf32>
    %cst_12 = arith.constant 9.99999996E-13 : f32
    %67 = vector.broadcast %cst_12 : f32 to vector<16x1xf32>
    %68 = arith.addf %66, %67 : vector<16x1xf32>
    %69 = math.rsqrt %68 : vector<16x1xf32>
    %70 = vector.broadcast %69 : vector<16x1xf32> to vector<16x128xf32>
    %71 = arith.mulf %61, %70 : vector<16x128xf32>
    %72 = vector.broadcast %54 : vector<1x128xf32> to vector<16x128xf32>
    %73 = arith.mulf %71, %72 : vector<16x128xf32>
    %74 = vector.broadcast %55 : vector<1x128xf32> to vector<16x128xf32>
    %75 = arith.addf %73, %74 : vector<16x128xf32>
    %c0_13 = arith.constant 0 : index
    %c0_14 = arith.constant 0 : index
    %76 = vector.load %arg5[%c0_13, %c0_14] : memref<16x128xf32, #tpu.memory_space<vmem>>, vector<16x128xf32>
    tpu.vector_store %arg5[%c0_13, %c0_14], %75 {strides = array<i32>} : memref<16x128xf32, #tpu.memory_space<vmem>>, vector<16x128xf32>,
    return
  }
  func.func @transform_0(%arg0: i32) -> (i32, i32) {
    %c0_i32 = arith.constant 0 : i32
    %c0_i32_0 = arith.constant 0 : i32
    return %arg0, %c0_i32 : i32, i32
  }
  func.func @transform_1(%arg0: i32) -> (i32, i32) {
    %c0_i32 = arith.constant 0 : i32
    %c0_i32_0 = arith.constant 0 : i32
    %c0_i32_1 = arith.constant 0 : i32
    return %c0_i32, %c0_i32_0 : i32, i32
  }
  func.func @transform_2(%arg0: i32) -> (i32, i32) {
    %c0_i32 = arith.constant 0 : i32
    %c0_i32_0 = arith.constant 0 : i32
    %c0_i32_1 = arith.constant 0 : i32
    return %c0_i32, %c0_i32_0 : i32, i32
  }
  func.func @transform_3(%arg0: i32) -> (i32, i32) {
    %c0_i32 = arith.constant 0 : i32
    %c0_i32_0 = arith.constant 0 : i32
    %c0_i32_1 = arith.constant 0 : i32
    return %c0_i32, %c0_i32_0 : i32, i32
  }
  func.func @transform_4(%arg0: i32) -> (i32, i32) {
    %c0_i32 = arith.constant 0 : i32
    %c0_i32_0 = arith.constant 0 : i32
    return %arg0, %c0_i32 : i32, i32
  }
}

</mosaic_0001>

<llo_original>
// kernel: tpu_custom_call.1
$region0: #{tpu_custom_call.1}
  #allocation0 [shape = 'u32[]', space=smem, size = 0x4, offset = 0x4, fixed_abs, tag = 'smem constant byte address 0x4 - core index']
  #allocation1 [shape = 'u32[144,128]{1,0:T(1,128)}', space=vmem, size = 0x12000, scoped, tag = 'internal scratch']
  %s0 = inlined_call_operand.vmem [shape: s32[16,8], index: 0, kind: input, shape index: {}]
  %s1 = inlined_call_operand.hbm [shape: bf16[128,128], index: 1, kind: input, shape index: {}]
  %s2 = inlined_call_operand.vmem [shape: f32[1,128], index: 2, kind: input, shape index: {}]
  %s3 = inlined_call_operand.vmem [shape: f32[1,128], index: 3, kind: input, shape index: {}]
  %s4 = inlined_call_operand.hbm [shape: f32[16,128], index: 4, kind: output, shape index: {}]
  %s5 = sld [smem:[#allocation0]]
  $region30: #{tpu_custom_call.1} parent=0
    _
  %s7 = ssub.s32 1, %s5
  %s8 = scalar_select 0, %s7, %s5
  $region1: #{tpu_custom_call.1} parent=0
    #allocation2 [shape = 'u8[32768]{0}', space=vmem, size = 0x8000, scoped, tag = 'input window, operand 1, single buffered']
    #allocation3 [shape = 's32[1]{0}', space=sflag, size = 0x4, scoped, tag = 'scoped memory for tpu_custom_call.1']
    #allocation4 [shape = 's32[1]{0}', space=sflag, size = 0x4, scoped, tag = 'scoped memory for tpu_custom_call.1']
    #allocation5 [shape = 'u8[8192]{0}', space=vmem, size = 0x2000, scoped, tag = 'output window, operand 0, single buffered']
    %9 = vsyncpa [#allocation3], 0
    %10 = vsyncpa [#allocation4], 0
    // Predicated region
    $region2: #{tpu_custom_call.1} parent=1 // pred_check
      _
    $region3: #{tpu_custom_call.1} parent=1 // pred_check_branch
      %12 = sbr.rel (0) target = $region5
    $region4: #{tpu_custom_call.1} parent=1 // pred_region
      _
    $region5: #{tpu_custom_call.1} parent=1 // pred_fallthru
      _
    // Predicated region
    $region6: #{tpu_custom_call.1} parent=1 // pred_check
      _
    $region7: #{tpu_custom_call.1} parent=1 // pred_check_branch
      %14 = sbr.rel (0) target = $region9
    $region8: #{tpu_custom_call.1} parent=1 // pred_region
      %s16 = ssub.s32 1024, 1024
      %17 = vsyncadd [#allocation3], %s16
      %s18 = sshll.u32 [#allocation2], 4
      %s19 = int_to_ptr.vmem [resolvable:$true] %s18
      %24 = dma.hbm_to_vmem [thread:$0]  %s1, 1024, %s19, [#allocation3], 64, 64, 4
    $region9: #{tpu_custom_call.1} parent=1 // pred_fallthru
      _
    // Predicated region
    $region10: #{tpu_custom_call.1} parent=1 // pred_check
      _
    $region11: #{tpu_custom_call.1} parent=1 // pred_check_branch
      %26 = sbr.rel (0) target = $region13
    $region12: #{tpu_custom_call.1} parent=1 // pred_region
      _
    $region13: #{tpu_custom_call.1} parent=1 // pred_fallthru
      _
    // Predicated region
    $region14: #{tpu_custom_call.1} parent=1 // pred_check
      _
    $region15: #{tpu_custom_call.1} parent=1 // pred_check_branch
      %28 = sbr.rel (0) target = $region17
    $region16: #{tpu_custom_call.1} parent=1 // pred_region
      _
    $region17: #{tpu_custom_call.1} parent=1 // pred_fallthru
      _
    // Predicated region
    $region18: #{tpu_custom_call.1} parent=1 // pred_check
      _
    $region19: #{tpu_custom_call.1} parent=1 // pred_check_branch
      %30 = sbr.rel (0) target = $region21
    $region20: #{tpu_custom_call.1} parent=1 // pred_region
      %31 = dma.done [#allocation3], 1024
    $region21: #{tpu_custom_call.1} parent=1 // pred_fallthru
      _
    %v33 = vld [vmem:[%s0] sm:$0xff]
    %v34 = vld [vmem:[%s0 + $0x8] sm:$0xff]
    %v35 = vlaneseq
    %v36 = vand.u32 %v35, 127
    %37 = vset.pattern.permute.xlu0 0
    %38 = vperm.xlu0 %37, %v33
    %v39 = vpop.permute.xlu0 %38
    %40 = vset.pattern.permute.xlu0 0
    %41 = vperm.xlu0 %40, %v34
    %v42 = vpop.permute.xlu0 %41
    %vm43 = vcmp.eq.s32.totalorder %v39, %v36
    %vm44 = vcmp.eq.s32.totalorder %v42, %v36
    %v45 = vsel %vm43, 1, 0
    %v46 = vsel %vm44, 1, 0
    %v47 = vcvt.s32.f32 %v45
    %v48 = vcvt.s32.f32 %v46
    %v49 = vpack.c.bf16 %v48, %v47
    %v50 = vadd.bf16 %v49, 0
    %51 = vset.pattern.permute.xlu0 1
    %52 = vperm.xlu0 %51, %v33
    %v53 = vpop.permute.xlu0 %52
    %54 = vset.pattern.permute.xlu0 1
    %55 = vperm.xlu0 %54, %v34
    %v56 = vpop.permute.xlu0 %55
    %vm57 = vcmp.eq.s32.totalorder %v53, %v36
    %vm58 = vcmp.eq.s32.totalorder %v56, %v36
    %v59 = vsel %vm57, 1, 0
    %v60 = vsel %vm58, 1, 0
    %v61 = vcvt.s32.f32 %v59
    %v62 = vcvt.s32.f32 %v60
    %v63 = vpack.c.bf16 %v62, %v61
    %v64 = vadd.bf16 %v50, %v63
    %65 = vset.pattern.permute.xlu0 2
    %66 = vperm.xlu0 %65, %v33
    %v67 = vpop.permute.xlu0 %66
    %68 = vset.pattern.permute.xlu0 2
    %69 = vperm.xlu0 %68, %v34
    %v70 = vpop.permute.xlu0 %69
    %vm71 = vcmp.eq.s32.totalorder %v67, %v36
    %vm72 = vcmp.eq.s32.totalorder %v70, %v36
    %v73 = vsel %vm71, 1, 0
    %v74 = vsel %vm72, 1, 0
    %v75 = vcvt.s32.f32 %v73
    %v76 = vcvt.s32.f32 %v74
    %v77 = vpack.c.bf16 %v76, %v75
    %v78 = vadd.bf16 %v64, %v77
    %79 = vset.pattern.permute.xlu0 3
    %80 = vperm.xlu0 %79, %v33
    %v81 = vpop.permute.xlu0 %80
    %82 = vset.pattern.permute.xlu0 3
    %83 = vperm.xlu0 %82, %v34
    %v84 = vpop.permute.xlu0 %83
    %vm85 = vcmp.eq.s32.totalorder %v81, %v36
    %vm86 = vcmp.eq.s32.totalorder %v84, %v36
    %v87 = vsel %vm85, 1, 0
    %v88 = vsel %vm86, 1, 0
    %v89 = vcvt.s32.f32 %v87
    %v90 = vcvt.s32.f32 %v88
    %v91 = vpack.c.bf16 %v90, %v89
    %v92 = vadd.bf16 %v78, %v91
    %93 = vset.pattern.permute.xlu0 4
    %94 = vperm.xlu0 %93, %v33
    %v95 = vpop.permute.xlu0 %94
    %96 = vset.pattern.permute.xlu0 4
    %97 = vperm.xlu0 %96, %v34
    %v98 = vpop.permute.xlu0 %97
    %vm99 = vcmp.eq.s32.totalorder %v95, %v36
    %vm100 = vcmp.eq.s32.totalorder %v98, %v36
    %v101 = vsel %vm99, 1, 0
    %v102 = vsel %vm100, 1, 0
    %v103 = vcvt.s32.f32 %v101
    %v104 = vcvt.s32.f32 %v102
    %v105 = vpack.c.bf16 %v104, %v103
    %v106 = vadd.bf16 %v92, %v105
    %107 = vset.pattern.permute.xlu0 5
    %108 = vperm.xlu0 %107, %v33
    %v109 = vpop.permute.xlu0 %108
    %110 = vset.pattern.permute.xlu0 5
    %111 = vperm.xlu0 %110, %v34
    %v112 = vpop.permute.xlu0 %111
    %vm113 = vcmp.eq.s32.totalorder %v109, %v36
    %vm114 = vcmp.eq.s32.totalorder %v112, %v36
    %v115 = vsel %vm113, 1, 0
    %v116 = vsel %vm114, 1, 0
    %v117 = vcvt.s32.f32 %v115
    %v118 = vcvt.s32.f32 %v116
    %v119 = vpack.c.bf16 %v118, %v117
    %v120 = vadd.bf16 %v106, %v119
    %121 = vset.pattern.permute.xlu0 6
    %122 = vperm.xlu0 %121, %v33
    %v123 = vpop.permute.xlu0 %122
    %124 = vset.pattern.permute.xlu0 6
    %125 = vperm.xlu0 %124, %v34
    %v126 = vpop.permute.xlu0 %125
    %vm127 = vcmp.eq.s32.totalorder %v123, %v36
    %vm128 = vcmp.eq.s32.totalorder %v126, %v36
    %v129 = vsel %vm127, 1, 0
    %v130 = vsel %vm128, 1, 0
    %v131 = vcvt.s32.f32 %v129
    %v132 = vcvt.s32.f32 %v130
    %v133 = vpack.c.bf16 %v132, %v131
    %v134 = vadd.bf16 %v120, %v133
    %v135 = vld [vmem:[#allocation2] sm:$0xf]
    %v136 = vld [vmem:[#allocation2 + $0x4] sm:$0xf]
    %v137 = vld [vmem:[#allocation2 + $0x8] sm:$0xf]
    %v138 = vld [vmem:[#allocation2 + $0xc] sm:$0xf]
    %v139 = vld [vmem:[#allocation2 + $0x10] sm:$0xf]
    %v140 = vld [vmem:[#allocation2 + $0x14] sm:$0xf]
    %v141 = vld [vmem:[#allocation2 + $0x18] sm:$0xf]
    %v142 = vld [vmem:[#allocation2 + $0x1c] sm:$0xf]
    %v143 = vld [vmem:[#allocation2 + $0x20] sm:$0xf]
    %v144 = vld [vmem:[#allocation2 + $0x24] sm:$0xf]
    %v145 = vld [vmem:[#allocation2 + $0x28] sm:$0xf]
    %v146 = vld [vmem:[#allocation2 + $0x2c] sm:$0xf]
    %v147 = vld [vmem:[#allocation2 + $0x30] sm:$0xf]
    %v148 = vld [vmem:[#allocation2 + $0x34] sm:$0xf]
    %v149 = vld [vmem:[#allocation2 + $0x38] sm:$0xf]
    %v150 = vld [vmem:[#allocation2 + $0x3c] sm:$0xf]
    %v167 = vunpack.c.l.b16 %v135
    %v168 = vunpack.c.l.b16 %v136
    %v169 = vunpack.c.l.b16 %v137
    %v170 = vunpack.c.l.b16 %v138
    %v171 = vunpack.c.l.b16 %v139
    %v172 = vunpack.c.l.b16 %v140
    %v173 = vunpack.c.l.b16 %v141
    %v174 = vunpack.c.l.b16 %v142
    %v175 = vunpack.c.l.b16 %v143
    %v176 = vunpack.c.l.b16 %v144
    %v177 = vunpack.c.l.b16 %v145
    %v178 = vunpack.c.l.b16 %v146
    %v179 = vunpack.c.l.b16 %v147
    %v180 = vunpack.c.l.b16 %v148
    %v181 = vunpack.c.l.b16 %v149
    %v182 = vunpack.c.l.b16 %v150
    %v183 = vpack.c.b16 %v168, %v167
    %v184 = vpack.c.b16 %v170, %v169
    %v185 = vpack.c.b16 %v172, %v171
    %v186 = vpack.c.b16 %v174, %v173
    %v187 = vpack.c.b16 %v176, %v175
    %v188 = vpack.c.b16 %v178, %v177
    %v189 = vpack.c.b16 %v180, %v179
    %v190 = vpack.c.b16 %v182, %v181
    %199 = vmatprep.subr.bf16.mxu0 0
    %200 = vmatpush1.bf16.msra.mxu0 %v183
    %201 = vmatprep.subr.bf16.mxu0 0
    %202 = vmatpush1.bf16.msra.mxu0 %v184
    %203 = vmatprep.subr.bf16.mxu0 0
    %204 = vmatpush1.bf16.msra.mxu0 %v185
    %205 = vmatprep.subr.bf16.mxu0 0
    %206 = vmatpush1.bf16.msra.mxu0 %v186
    %207 = vmatprep.subr.bf16.mxu0 0
    %208 = vmatpush1.bf16.msra.mxu0 %v187
    %209 = vmatprep.subr.bf16.mxu0 0
    %210 = vmatpush1.bf16.msra.mxu0 %v188
    %211 = vmatprep.subr.bf16.mxu0 0
    %212 = vmatpush1.bf16.msra.mxu0 %v189
    %213 = vmatprep.subr.bf16.mxu0 0
    %214 = vmatpush1.bf16.msra.mxu0 %v190
    %215 = vmatprep.subr.bf16.mxu0 0
    %216 = vmatpush1.bf16.msra.mxu0 0
    %217 = vmatprep.subr.bf16.mxu0 0
    %218 = vmatpush1.bf16.msra.mxu0 0
    %219 = vmatprep.subr.bf16.mxu0 0
    %220 = vmatpush1.bf16.msra.mxu0 0
    %221 = vmatprep.subr.bf16.mxu0 0
    %222 = vmatpush1.bf16.msra.mxu0 0
    %223 = vmatprep.subr.bf16.mxu0 0
    %224 = vmatpush1.bf16.msra.mxu0 0
    %225 = vmatprep.subr.bf16.mxu0 0
    %226 = vmatpush1.bf16.msra.mxu0 0
    %227 = vmatprep.subr.bf16.mxu0 0
    %228 = vmatpush1.bf16.msra.mxu0 0
    %229 = vmatprep.subr.bf16.mxu0 0
    %230 = vmatpush1.bf16.msra.mxu0 0
    %231 = vmatprep.mubr.bf16.mxu0 0
    %232 = vmatmul.mubr.bf16.gmra.mrb[0].mxu0 %v134
    %v233 = vpop.f32.mrb[0].mxu0
    %v234 = vadd.f32 0.0, %v233
    %v235 = vpop.f32.mrb[0].mxu0
    %v236 = vpop.f32.mrb[0].mxu0
    %v237 = vadd.f32 0.0, %v236
    %v238 = vpop.f32.mrb[0].mxu0
    %239 = vdwg.mxu0
    %v240 = vld [vmem:[%s2] sm:$0x1]
    %v241 = vld [vmem:[%s3] sm:$0x1]
    %242 = vadd.xlane.f32.xlu0 %v234
    %v243 = vpop.xlane.xlu0 %242
    %244 = vadd.xlane.f32.xlu0 %v237
    %v245 = vpop.xlane.xlu0 %244
    %v246 = vrcp.pop 128.0
    %v247 = vmul.f32 %v243, %v246
    %v248 = vmul.f32 %v245, %v246
    %v249 = vsub.f32 %v234, %v247
    %v250 = vsub.f32 %v237, %v248
    %v251 = vmul.f32 %v249, %v249
    %v252 = vmul.f32 %v250, %v250
    %253 = vadd.xlane.f32.xlu0 %v251
    %v254 = vpop.xlane.xlu0 %253
    %255 = vadd.xlane.f32.xlu0 %v252
    %v256 = vpop.xlane.xlu0 %255
    %v257 = vmul.f32 %v254, %v246
    %v258 = vmul.f32 %v256, %v246
    %v259 = vadd.f32 %v257, 1e-12
    %v260 = vadd.f32 %v258, 1e-12
    %v261 = vrsqrt.pop %v259
    %v262 = vrsqrt.pop %v260
    %v263 = vmul.f32 %v249, %v261
    %v264 = vmul.f32 %v250, %v262
    %v266 = vlaneseq
    %v267 = vshrl.u32 %v266, 7
    %v268 = vsub.s32 0, %v267
    %v269 = vrot.slane %v240, %v268
    %v271 = vmul.f32 %v263, %v269
    %v272 = vmul.f32 %v264, %v269
    %v274 = vlaneseq
    %v275 = vshrl.u32 %v274, 7
    %v276 = vsub.s32 0, %v275
    %v277 = vrot.slane %v241, %v276
    %v279 = vadd.f32 %v271, %v277
    %v280 = vadd.f32 %v272, %v277
    %281 = vst [vmem:[#allocation5] sm:$0xff] %v279
    %282 = vst [vmem:[#allocation5 + $0x8] sm:$0xff] %v280
    // Predicated region
    $region22: #{tpu_custom_call.1} parent=1 // pred_check
      _
    $region23: #{tpu_custom_call.1} parent=1 // pred_check_branch
      %284 = sbr.rel (0) target = $region25
    $region24: #{tpu_custom_call.1} parent=1 // pred_region
      %s286 = ssub.s32 256, 256
      %287 = vsyncadd [#allocation4], %s286
      %s288 = sshll.u32 [#allocation5], 4
      %s289 = int_to_ptr.vmem [resolvable:$true] %s288
      %294 = dma.vmem_to_hbm [thread:$0]  %s289, 256, %s4, [#allocation4], 128, 128, 8
    $region25: #{tpu_custom_call.1} parent=1 // pred_fallthru
      _
    // Predicated region
    $region26: #{tpu_custom_call.1} parent=1 // pred_check
      _
    $region27: #{tpu_custom_call.1} parent=1 // pred_check_branch
      %296 = sbr.rel (0) target = $region29
    $region28: #{tpu_custom_call.1} parent=1 // pred_region
      %297 = dma.done [#allocation4], 256
    $region29: #{tpu_custom_call.1} parent=1 // pred_fallthru
      _
    %298 = vsyncpa [#allocation3], 1
    %299 = vsyncpa [#allocation4], 1

</llo_original>
